<compile_context>
chip_gen: v6e
topology: v6e:2x2x1
jax: 0.10.0
libtpu: 0.0.40
codegen_flags: <defaults>
</compile_context>

<pallas_src>
import jax
import jax.numpy as jnp
from jax import lax
from jax.experimental import pallas as pl
from jax.experimental.pallas import tpu as pltpu


def _flash_self_attention_kernel(xq_ref, xkv_ref, wq_ref, wk_ref, wv_ref, wo_ref,
                                 out_ref,
                                 q_scr, m_scr, l_scr, acc_scr, oacc_scr):
    """Grid = (b, q_tiles, heads, kv_tiles); heads & kv are reduction axes.

    xq_ref  : (1, tq, d)  query-side x tile (resident across heads & kv steps)
    xkv_ref : (1, tk, d)  key/value-side x tile (streamed along kv axis)
    wq_ref  : (1, d, e)   per-head q weight (softmax scale folded in)
    wk_ref  : (1, d, e)   per-head k weight
    wv_ref  : (1, d, e)   per-head v weight
    wo_ref  : (1, e, d)   per-head slice of the folded output projection wo2
    out_ref : (1, tq, d)  output block (written once, at the last head/kv step)

    Scratch (persists across grid steps):
    q_scr   : (tq, e) compute dtype   q tile, computed once per (b, q-tile, head)
    m_scr   : (tq, 1) f32             running max
    l_scr   : (tq, 1) f32             running sum
    acc_scr : (tq, e) f32             per-head unnormalized PV accumulator
    oacc_scr: (tq, d) f32             cross-head projected output accumulator
    """
    hi = pl.program_id(2)
    ki = pl.program_id(3)
    nh = pl.num_programs(2)
    nk = pl.num_programs(3)

    # Zero the cross-head output accumulator at the first (head, kv) step of
    # this (batch, q-tile) block.
    @pl.when(jnp.logical_and(hi == 0, ki == 0))
    def _():
        oacc_scr[...] = jnp.zeros_like(oacc_scr)

    # Per-head init: project the q tile once, reset online-softmax stats.
    @pl.when(ki == 0)
    def _():
        q = jnp.dot(xq_ref[0], wq_ref[0], preferred_element_type=jnp.float32)
        q_scr[...] = q.astype(q_scr.dtype)
        m_scr[...] = jnp.full_like(m_scr, -jnp.inf)
        l_scr[...] = jnp.zeros_like(l_scr)
        acc_scr[...] = jnp.zeros_like(acc_scr)

    xkv = xkv_ref[0]                      # (tk, d), compute dtype
    cdt = xkv.dtype

    # K/V projections for this kv tile (MXU, f32 accumulate, operands in cdt).
    k = jnp.dot(xkv, wk_ref[0], preferred_element_type=jnp.float32).astype(cdt)
    v = jnp.dot(xkv, wv_ref[0], preferred_element_type=jnp.float32).astype(cdt)

    # Scores: contract the shared e axis directly (no explicit transpose).
    s = lax.dot_general(q_scr[...], k,
                        dimension_numbers=(((1,), (1,)), ((), ())),
                        preferred_element_type=jnp.float32)     # (tq, tk) f32

    # Online softmax update (all stats in f32 — v5e VPU/EUP has no bf16).
    m_prev = m_scr[...]
    m_new = jnp.maximum(m_prev, jnp.max(s, axis=-1, keepdims=True))
    alpha = jnp.exp(m_prev - m_new)                               # (tq, 1)
    p = jnp.exp(s - m_new)                                        # (tq, tk)
    l_scr[...] = alpha * l_scr[...] + jnp.sum(p, axis=-1, keepdims=True)
    acc_scr[...] = alpha * acc_scr[...] + jnp.dot(
        p.astype(cdt), v, preferred_element_type=jnp.float32)    # (tq, e)
    m_scr[...] = m_new

    # Per-head finalize: exact f32 normalization (correctness fix), then project
    # with this head's slice of the folded output weight and accumulate.
    @pl.when(ki == nk - 1)
    def _():
        o_h = acc_scr[...] / l_scr[...]                           # (tq, e) f32
        oacc_scr[...] += jnp.dot(o_h.astype(cdt), wo_ref[0],
                                 preferred_element_type=jnp.float32)

    # Single store per output block, at the very last (head, kv) step.
    @pl.when(jnp.logical_and(hi == nh - 1, ki == nk - 1))
    def _():
        out_ref[...] = oacc_scr[...].astype(out_ref.dtype).reshape(out_ref.shape)


def _tpu_generation():
    try:
        kind = jax.devices()[0].device_kind.lower()
    except Exception:
        return None
    for g in ("v7", "v6", "v5"):
        if g in kind:
            return g
    return None


def _pick_tile(n, preferred):
    """Largest tile <= preferred that divides n and is 8-aligned (or n itself)."""
    if n <= preferred:
        return n
    for cand in range(preferred, 7, -1):
        if n % cand == 0 and cand % 8 == 0:
            return cand
    return n


def self_attention_pallas(x, wq_t, wkv_t, wo_t, heads, *, kv=None,
                          compute_dtype=jnp.bfloat16, tq=None, tk=None):
    """SelfAttention forward (incl. the module's double to_out).

    x      : (b, t, d)
    wq_t   : (d, dh)      to_q weight, pre-transposed (in, out)
    wkv_t  : (d, 2*dh)    to_kv weight, pre-transposed
    wo_t   : (dh, d)      to_out weight, pre-transposed
    kv     : optional (b, t_kv, d) separate key/value source
    compute_dtype : MXU operand dtype (default bf16; accumulation stays f32).
    """
    b, t, d = x.shape
    dh = wq_t.shape[1]
    assert dh % heads == 0, "dim_hidden must be divisible by heads"
    e = dh // heads
    assert wkv_t.shape == (d, 2 * dh), "wkv_t must be (dim, 2*dim_hidden)"
    assert wo_t.shape == (dh, d), "wo_t must be (dim_hidden, dim)"
    # The reference applies to_out twice, only well defined when dim_hidden == dim.
    assert dh == d, "double to_out in the reference requires dim_hidden == dim"

    x_kv = x if kv is None else kv
    bk, t_kv, dk = x_kv.shape
    assert bk == b and dk == d

    out_dtype = x.dtype
    cdt = compute_dtype if compute_dtype is not None else x.dtype

    # ---- Host/XLA-side weight preprocessing (done once, in f32) ----
    scale = float(e) ** -0.5
    wq_h = (wq_t * scale).reshape(d, heads, e).transpose(1, 0, 2)   # (h, d, e)
    wk_h = wkv_t[:, :dh].reshape(d, heads, e).transpose(1, 0, 2)    # (h, d, e)
    wv_h = wkv_t[:, dh:].reshape(d, heads, e).transpose(1, 0, 2)    # (h, d, e)
    wo2_h = (wo_t @ wo_t).reshape(heads, e, d)                      # (h, e, d)

    x_q = x.astype(cdt)
    x_k = x_kv.astype(cdt)
    wq_h = wq_h.astype(cdt)
    wk_h = wk_h.astype(cdt)
    wv_h = wv_h.astype(cdt)
    wo2_h = wo2_h.astype(cdt)

    # ---- Per-generation tile / VMEM budget ----
    gen = _tpu_generation()
    if gen in ("v5", "v6"):
        tq_pref, tk_pref, vmem_limit = 256, 512, 96 * 1024 * 1024   # 128 MiB VMEM
    else:  # v7x (64 MiB VMEM/TC) or unknown backend: conservative budget
        tq_pref, tk_pref, vmem_limit = 256, 256, 48 * 1024 * 1024

    if tq is None:
        tq = _pick_tile(t, tq_pref)
    if tk is None:
        tk = _pick_tile(t_kv, tk_pref)
    assert t % tq == 0 and t_kv % tk == 0, "tile sizes must divide sequence lengths"
    nq = t // tq
    nk = t_kv // tk

    grid = (b, nq, heads, nk)

    # Advisory cost hint so XLA can schedule surrounding ops around the call.
    flops = int(2 * b * (t * d * dh + 2 * t_kv * d * dh)     # q, k, v projections
                + 4 * b * heads * t * t_kv * e               # QK^T + PV
                + 2 * b * t * dh * d)                        # folded output proj
    transcendentals = int(b * heads * t * t_kv)
    bytes_accessed = int(x.size * x.dtype.itemsize
                         + x_kv.size * x_kv.dtype.itemsize
                         + (wq_t.size + wkv_t.size + wo_t.size) * wq_t.dtype.itemsize
                         + b * t * d * jnp.dtype(out_dtype).itemsize)

    out = pl.pallas_call(
        _flash_self_attention_kernel,
        out_shape=jax.ShapeDtypeStruct((b, t, d), out_dtype),
        grid=grid,
        in_specs=[
            # q-side x tile: resident across the inner (head, kv) axes.
            pl.BlockSpec((1, tq, d), lambda bi, qi, hi, ki: (bi, qi, 0)),
            # kv-side x tile: streamed along the kv axis (pipelined DMA).
            pl.BlockSpec((1, tk, d), lambda bi, qi, hi, ki: (bi, ki, 0)),
            # Per-head weights: BlockSpec delivers the head split, no in-kernel
            # slicing/transpose.  They are small (d*e), so default 2-deep
            # buffering costs little VMEM even at d = dh = 1024.
            pl.BlockSpec((1, d, e), lambda bi, qi, hi, ki: (hi, 0, 0)),
            pl.BlockSpec((1, d, e), lambda bi, qi, hi, ki: (hi, 0, 0)),
            pl.BlockSpec((1, d, e), lambda bi, qi, hi, ki: (hi, 0, 0)),
            pl.BlockSpec((1, e, d), lambda bi, qi, hi, ki: (hi, 0, 0)),
        ],
        out_specs=pl.BlockSpec((1, tq, d), lambda bi, qi, hi, ki: (bi, qi, 0)),
        scratch_shapes=[
            pltpu.VMEM((tq, e), cdt),           # q tile
            pltpu.VMEM((tq, 1), jnp.float32),   # m (running max)
            pltpu.VMEM((tq, 1), jnp.float32),   # l (running sum)
            pltpu.VMEM((tq, e), jnp.float32),   # per-head PV accumulator
            pltpu.VMEM((tq, d), jnp.float32),   # cross-head output accumulator
        ],
        compiler_params=pltpu.CompilerParams(
            # b and q-tile axes are parallel (megacore sharding); heads and kv
            # are reduction axes (accumulate into resident scratch/output).
            dimension_semantics=("parallel", "parallel", "arbitrary", "arbitrary"),
            vmem_limit_bytes=vmem_limit,
        ),
        cost_estimate=pl.CostEstimate(flops=flops,
                                      transcendentals=transcendentals,
                                      bytes_accessed=bytes_accessed),
    )(x_q, x_k, wq_h, wk_h, wv_h, wo2_h)

    return out


def self_attention_ref(x, wq_t, wkv_t, wo_t, heads):
    """Pure-JAX reference mirroring the PyTorch forward (incl. double to_out)."""
    q = x @ wq_t
    kv = x @ wkv_t
    dh = q.shape[-1]
    e = dh // heads
    k, v = kv[..., :dh], kv[..., dh:]
    b, t, _ = q.shape

    def merge(z):
        return z.reshape(b, t, heads, e).transpose(0, 2, 1, 3).reshape(b * heads, t, e)

    q, k, v = map(merge, (q, k, v))
    dots = jnp.einsum("bie,bje->bij", q, k) * (e ** -0.5)
    attn = jax.nn.softmax(dots, axis=-1)
    o = jnp.einsum("bij,bje->bie", attn, v)
    o = o.reshape(b, heads, t, e).transpose(0, 2, 1, 3).reshape(b, t, dh)
    o = o @ wo_t
    o = o @ wo_t
    return o


if __name__ == "__main__":
    # dim = 32, heads = 4 -> dim_heads = 8, dim_hidden = 32 (== dim, so the
    # double to_out of the reference forward is well defined).
    b, t, dim, heads = 2, 8, 32, 4
    dim_heads = dim // heads
    dim_hidden = dim_heads * heads

    key = jax.random.PRNGKey(0)
    kx, kx2, kq, kkv, ko = jax.random.split(key, 5)

    x = jax.random.normal(kx, (b, t, dim), dtype=jnp.float32)

    # PyTorch Linear weights are (out_features, in_features); build with that
    # convention, then transpose for the kernel.
    wq = jax.random.normal(kq, (dim_hidden, dim), dtype=jnp.float32) * (dim ** -0.5)
    wkv = jax.random.normal(kkv, (2 * dim_hidden, dim), dtype=jnp.float32) * (dim ** -0.5)
    wo = jax.random.normal(ko, (dim, dim_hidden), dtype=jnp.float32) * (dim_hidden ** -0.5)
    wq_t, wkv_t, wo_t = wq.T, wkv.T, wo.T

    ref = self_attention_ref(x, wq_t, wkv_t, wo_t, heads)

    # 1) f32 compute path: exact divide -> tight parity with the reference.
    out_f32 = jax.block_until_ready(
        self_attention_pallas(x, wq_t, wkv_t, wo_t, heads, compute_dtype=jnp.float32))
    assert out_f32.shape == (b, t, dim)
    assert jnp.allclose(out_f32, ref, atol=2e-3, rtol=2e-3), "f32 kernel mismatch vs reference"

    # 2) default path: bf16 MXU operands, f32 accumulation & softmax stats.
    #    Loose tolerance reflects bf16 operand rounding only.
    out_bf16 = jax.block_until_ready(
        self_attention_pallas(x, wq_t, wkv_t, wo_t, heads))
    assert out_bf16.shape == (b, t, dim)
    assert jnp.allclose(out_bf16, ref, atol=1e-1, rtol=1e-1), "bf16 kernel mismatch vs reference"

    # 3) multi-tile flash path: exercises the online-softmax accumulation across
    #    kv tiles, multiple q tiles, and cross-head output accumulation.
    t2 = 32
    x2 = jax.random.normal(kx2, (b, t2, dim), dtype=jnp.float32)
    ref2 = self_attention_ref(x2, wq_t, wkv_t, wo_t, heads)
    out2 = jax.block_until_ready(
        self_attention_pallas(x2, wq_t, wkv_t, wo_t, heads,
                              compute_dtype=jnp.float32, tq=16, tk=8))
    assert out2.shape == (b, t2, dim)
    assert jnp.allclose(out2, ref2, atol=2e-3, rtol=2e-3), "tiled f32 kernel mismatch vs reference"

    print("KERNEL_OK")
</pallas_src>

<mosaic_0001>
module attributes {stable_mosaic.version = 11 : i64} {
  func.func @_flash_self_attention_kernel(%arg0: i32, %arg1: i32, %arg2: i32, %arg3: i32, %arg4: memref<1x8x32xf32, #tpu.memory_space<vmem>>, %arg5: memref<1x8x32xf32, #tpu.memory_space<vmem>>, %arg6: memref<1x32x8xf32, #tpu.memory_space<vmem>>, %arg7: memref<1x32x8xf32, #tpu.memory_space<vmem>>, %arg8: memref<1x32x8xf32, #tpu.memory_space<vmem>>, %arg9: memref<1x8x32xf32, #tpu.memory_space<vmem>>, %arg10: memref<1x8x32xf32, #tpu.memory_space<vmem>>, %arg11: memref<8x8xf32, #tpu.memory_space<vmem>>, %arg12: memref<8x1xf32, #tpu.memory_space<vmem>>, %arg13: memref<8x1xf32, #tpu.memory_space<vmem>>, %arg14: memref<8x8xf32, #tpu.memory_space<vmem>>, %arg15: memref<8x32xf32, #tpu.memory_space<vmem>>) attributes {dimension_semantics = [#tpu.dimension_semantics<parallel>, #tpu.dimension_semantics<parallel>, #tpu.dimension_semantics<arbitrary>, #tpu.dimension_semantics<arbitrary>], iteration_bounds = array<i64: 2, 1, 4, 1>, scalar_prefetch = 0 : i64, scratch_operands = 5 : i64, tpu.core_type = #tpu.core_type<tc>, window_params = [{transform_indices = @transform_0, window_bounds = array<i64: 1, 8, 32>}, {transform_indices = @transform_1, window_bounds = array<i64: 1, 8, 32>}, {transform_indices = @transform_2, window_bounds = array<i64: 1, 32, 8>}, {transform_indices = @transform_3, window_bounds = array<i64: 1, 32, 8>}, {transform_indices = @transform_4, window_bounds = array<i64: 1, 32, 8>}, {transform_indices = @transform_5, window_bounds = array<i64: 1, 8, 32>}, {transform_indices = @transform_6, window_bounds = array<i64: 1, 8, 32>}]} {
    %c0_i32 = arith.constant 0 : i32
    %0 = arith.cmpi eq, %arg2, %c0_i32 : i32
    %c0_i32_0 = arith.constant 0 : i32
    %1 = arith.cmpi eq, %arg3, %c0_i32_0 : i32
    %2 = arith.andi %0, %1 : i1
    %3 = arith.extui %2 : i1 to i32
    %c0_i32_1 = arith.constant 0 : i32
    %4 = arith.cmpi ne, %3, %c0_i32_1 : i32
    scf.if %4 {
      %cst_35 = arith.constant 0.000000e+00 : f32
      %48 = vector.broadcast %cst_35 : f32 to vector<8x32xf32>
      %c0_36 = arith.constant 0 : index
      %c0_37 = arith.constant 0 : index
      %49 = vector.load %arg15[%c0_36, %c0_37] : memref<8x32xf32, #tpu.memory_space<vmem>>, vector<8x32xf32>
      tpu.vector_store %arg15[%c0_36, %c0_37], %48 {strides = array<i32>} : memref<8x32xf32, #tpu.memory_space<vmem>>, vector<8x32xf32>,
    } else {
    }
    %c0_i32_2 = arith.constant 0 : i32
    %5 = arith.cmpi eq, %arg3, %c0_i32_2 : i32
    %6 = arith.extui %5 : i1 to i32
    %c0_i32_3 = arith.constant 0 : i32
    %7 = arith.cmpi ne, %6, %c0_i32_3 : i32
    scf.if %7 {
      %c0_35 = arith.constant 0 : index
      %c0_36 = arith.constant 0 : index
      %c0_37 = arith.constant 0 : index
      %48 = vector.load %arg4[%c0_35, %c0_36, %c0_37] : memref<1x8x32xf32, #tpu.memory_space<vmem>>, vector<1x8x32xf32>
      %49 = vector.shape_cast %48 : vector<1x8x32xf32> to vector<8x32xf32>
      %c0_38 = arith.constant 0 : index
      %c0_39 = arith.constant 0 : index
      %c0_40 = arith.constant 0 : index
      %50 = vector.load %arg6[%c0_38, %c0_39, %c0_40] : memref<1x32x8xf32, #tpu.memory_space<vmem>>, vector<1x32x8xf32>
      %51 = vector.shape_cast %50 : vector<1x32x8xf32> to vector<32x8xf32>
      %cst_41 = arith.constant dense<0.000000e+00> : vector<8x8xf32>
      %52 = tpu.matmul %49, %51, %cst_41 {dimension_numbers = #tpu.dot_dimension_numbers<[1], [0], [0], [1], [0, 0, 1, 1], [], []>} : vector<8x32xf32>, vector<32x8xf32>, vector<8x8xf32> -> vector<8x8xf32>
      %c0_42 = arith.constant 0 : index
      %c0_43 = arith.constant 0 : index
      %53 = vector.load %arg11[%c0_42, %c0_43] : memref<8x8xf32, #tpu.memory_space<vmem>>, vector<8x8xf32>
      tpu.vector_store %arg11[%c0_42, %c0_43], %52 {strides = array<i32>} : memref<8x8xf32, #tpu.memory_space<vmem>>, vector<8x8xf32>,
      %cst_44 = arith.constant 0xFF800000 : f32
      %54 = vector.broadcast %cst_44 : f32 to vector<8x1xf32>
      %c0_45 = arith.constant 0 : index
      %c0_46 = arith.constant 0 : index
      %55 = vector.load %arg12[%c0_45, %c0_46] : memref<8x1xf32, #tpu.memory_space<vmem>>, vector<8x1xf32>
      tpu.vector_store %arg12[%c0_45, %c0_46], %54 {strides = array<i32>} : memref<8x1xf32, #tpu.memory_space<vmem>>, vector<8x1xf32>,
      %cst_47 = arith.constant 0.000000e+00 : f32
      %56 = vector.broadcast %cst_47 : f32 to vector<8x1xf32>
      %c0_48 = arith.constant 0 : index
      %c0_49 = arith.constant 0 : index
      %57 = vector.load %arg13[%c0_48, %c0_49] : memref<8x1xf32, #tpu.memory_space<vmem>>, vector<8x1xf32>
      tpu.vector_store %arg13[%c0_48, %c0_49], %56 {strides = array<i32>} : memref<8x1xf32, #tpu.memory_space<vmem>>, vector<8x1xf32>,
      %cst_50 = arith.constant 0.000000e+00 : f32
      %58 = vector.broadcast %cst_50 : f32 to vector<8x8xf32>
      %c0_51 = arith.constant 0 : index
      %c0_52 = arith.constant 0 : index
      %59 = vector.load %arg14[%c0_51, %c0_52] : memref<8x8xf32, #tpu.memory_space<vmem>>, vector<8x8xf32>
      tpu.vector_store %arg14[%c0_51, %c0_52], %58 {strides = array<i32>} : memref<8x8xf32, #tpu.memory_space<vmem>>, vector<8x8xf32>,
    } else {
    }
    %c0 = arith.constant 0 : index
    %c0_4 = arith.constant 0 : index
    %c0_5 = arith.constant 0 : index
    %8 = vector.load %arg5[%c0, %c0_4, %c0_5] : memref<1x8x32xf32, #tpu.memory_space<vmem>>, vector<1x8x32xf32>
    %9 = vector.shape_cast %8 : vector<1x8x32xf32> to vector<8x32xf32>
    %c0_6 = arith.constant 0 : index
    %c0_7 = arith.constant 0 : index
    %c0_8 = arith.constant 0 : index
    %10 = vector.load %arg7[%c0_6, %c0_7, %c0_8] : memref<1x32x8xf32, #tpu.memory_space<vmem>>, vector<1x32x8xf32>
    %11 = vector.shape_cast %10 : vector<1x32x8xf32> to vector<32x8xf32>
    %cst = arith.constant dense<0.000000e+00> : vector<8x8xf32>
    %12 = tpu.matmul %9, %11, %cst {dimension_numbers = #tpu.dot_dimension_numbers<[1], [0], [0], [1], [0, 0, 1, 1], [], []>} : vector<8x32xf32>, vector<32x8xf32>, vector<8x8xf32> -> vector<8x8xf32>
    %c0_9 = arith.constant 0 : index
    %c0_10 = arith.constant 0 : index
    %c0_11 = arith.constant 0 : index
    %13 = vector.load %arg8[%c0_9, %c0_10, %c0_11] : memref<1x32x8xf32, #tpu.memory_space<vmem>>, vector<1x32x8xf32>
    %14 = vector.shape_cast %13 : vector<1x32x8xf32> to vector<32x8xf32>
    %cst_12 = arith.constant dense<0.000000e+00> : vector<8x8xf32>
    %15 = tpu.matmul %9, %14, %cst_12 {dimension_numbers = #tpu.dot_dimension_numbers<[1], [0], [0], [1], [0, 0, 1, 1], [], []>} : vector<8x32xf32>, vector<32x8xf32>, vector<8x8xf32> -> vector<8x8xf32>
    %c0_13 = arith.constant 0 : index
    %c0_14 = arith.constant 0 : index
    %16 = vector.load %arg11[%c0_13, %c0_14] : memref<8x8xf32, #tpu.memory_space<vmem>>, vector<8x8xf32>
    %cst_15 = arith.constant dense<0.000000e+00> : vector<8x8xf32>
    %17 = tpu.matmul %16, %12, %cst_15 {dimension_numbers = #tpu.dot_dimension_numbers<[1], [1], [0], [0], [0, 0, 1, 0], [], []>} : vector<8x8xf32>, vector<8x8xf32>, vector<8x8xf32> -> vector<8x8xf32>
    %c0_16 = arith.constant 0 : index
    %c0_17 = arith.constant 0 : index
    %18 = vector.load %arg12[%c0_16, %c0_17] : memref<8x1xf32, #tpu.memory_space<vmem>>, vector<8x1xf32>
    %cst_18 = arith.constant dense<0xFF800000> : vector<8xf32>
    %19 = vector.multi_reduction <maximumf>, %17, %cst_18 [1] : vector<8x8xf32> to vector<8xf32>
    %20 = vector.shape_cast %19 : vector<8xf32> to vector<8x1xf32>
    %21 = arith.maximumf %18, %20 : vector<8x1xf32>
    %22 = arith.subf %18, %21 : vector<8x1xf32>
    %23 = math.exp %22 : vector<8x1xf32>
    %24 = vector.broadcast %21 : vector<8x1xf32> to vector<8x8xf32>
    %25 = arith.subf %17, %24 : vector<8x8xf32>
    %26 = math.exp %25 : vector<8x8xf32>
    %c0_19 = arith.constant 0 : index
    %c0_20 = arith.constant 0 : index
    %27 = vector.load %arg13[%c0_19, %c0_20] : memref<8x1xf32, #tpu.memory_space<vmem>>, vector<8x1xf32>
    %28 = arith.mulf %23, %27 : vector<8x1xf32>
    %cst_21 = arith.constant dense<0.000000e+00> : vector<8xf32>
    %29 = vector.multi_reduction <add>, %26, %cst_21 [1] : vector<8x8xf32> to vector<8xf32>
    %30 = vector.shape_cast %29 : vector<8xf32> to vector<8x1xf32>
    %31 = arith.addf %28, %30 : vector<8x1xf32>
    %c0_22 = arith.constant 0 : index
    %c0_23 = arith.constant 0 : index
    %32 = vector.load %arg13[%c0_22, %c0_23] : memref<8x1xf32, #tpu.memory_space<vmem>>, vector<8x1xf32>
    tpu.vector_store %arg13[%c0_22, %c0_23], %31 {strides = array<i32>} : memref<8x1xf32, #tpu.memory_space<vmem>>, vector<8x1xf32>,
    %c0_24 = arith.constant 0 : index
    %c0_25 = arith.constant 0 : index
    %33 = vector.load %arg14[%c0_24, %c0_25] : memref<8x8xf32, #tpu.memory_space<vmem>>, vector<8x8xf32>
    %34 = vector.broadcast %23 : vector<8x1xf32> to vector<8x8xf32>
    %35 = arith.mulf %34, %33 : vector<8x8xf32>
    %cst_26 = arith.constant dense<0.000000e+00> : vector<8x8xf32>
    %36 = tpu.matmul %26, %15, %cst_26 {dimension_numbers = #tpu.dot_dimension_numbers<[1], [0], [0], [1], [0, 0, 1, 1], [], []>} : vector<8x8xf32>, vector<8x8xf32>, vector<8x8xf32> -> vector<8x8xf32>
    %37 = arith.addf %35, %36 : vector<8x8xf32>
    %c0_27 = arith.constant 0 : index
    %c0_28 = arith.constant 0 : index
    %38 = vector.load %arg14[%c0_27, %c0_28] : memref<8x8xf32, #tpu.memory_space<vmem>>, vector<8x8xf32>
    tpu.vector_store %arg14[%c0_27, %c0_28], %37 {strides = array<i32>} : memref<8x8xf32, #tpu.memory_space<vmem>>, vector<8x8xf32>,
    %c0_29 = arith.constant 0 : index
    %c0_30 = arith.constant 0 : index
    %39 = vector.load %arg12[%c0_29, %c0_30] : memref<8x1xf32, #tpu.memory_space<vmem>>, vector<8x1xf32>
    tpu.vector_store %arg12[%c0_29, %c0_30], %21 {strides = array<i32>} : memref<8x1xf32, #tpu.memory_space<vmem>>, vector<8x1xf32>,
    %c0_i32_31 = arith.constant 0 : i32
    %40 = arith.cmpi eq, %arg3, %c0_i32_31 : i32
    %41 = arith.extui %40 : i1 to i32
    %c0_i32_32 = arith.constant 0 : i32
    %42 = arith.cmpi ne, %41, %c0_i32_32 : i32
    scf.if %42 {
      %c0_35 = arith.constant 0 : index
      %c0_36 = arith.constant 0 : index
      %48 = vector.load %arg14[%c0_35, %c0_36] : memref<8x8xf32, #tpu.memory_space<vmem>>, vector<8x8xf32>
      %c0_37 = arith.constant 0 : index
      %c0_38 = arith.constant 0 : index
      %49 = vector.load %arg13[%c0_37, %c0_38] : memref<8x1xf32, #tpu.memory_space<vmem>>, vector<8x1xf32>
      %50 = vector.broadcast %49 : vector<8x1xf32> to vector<8x8xf32>
      %51 = arith.divf %48, %50 : vector<8x8xf32>
      %c0_39 = arith.constant 0 : index
      %c0_40 = arith.constant 0 : index
      %52 = vector.load %arg15[%c0_39, %c0_40] : memref<8x32xf32, #tpu.memory_space<vmem>>, vector<8x32xf32>
      %c0_41 = arith.constant 0 : index
      %c0_42 = arith.constant 0 : index
      %c0_43 = arith.constant 0 : index
      %53 = vector.load %arg9[%c0_41, %c0_42, %c0_43] : memref<1x8x32xf32, #tpu.memory_space<vmem>>, vector<1x8x32xf32>
      %54 = vector.shape_cast %53 : vector<1x8x32xf32> to vector<8x32xf32>
      %cst_44 = arith.constant dense<0.000000e+00> : vector<8x32xf32>
      %55 = tpu.matmul %51, %54, %cst_44 {dimension_numbers = #tpu.dot_dimension_numbers<[1], [0], [0], [1], [0, 0, 1, 1], [], []>} : vector<8x8xf32>, vector<8x32xf32>, vector<8x32xf32> -> vector<8x32xf32>
      %56 = arith.addf %52, %55 : vector<8x32xf32>
      %c0_45 = arith.constant 0 : index
      %c0_46 = arith.constant 0 : index
      %57 = vector.load %arg15[%c0_45, %c0_46] : memref<8x32xf32, #tpu.memory_space<vmem>>, vector<8x32xf32>
      tpu.vector_store %arg15[%c0_45, %c0_46], %56 {strides = array<i32>} : memref<8x32xf32, #tpu.memory_space<vmem>>, vector<8x32xf32>,
    } else {
    }
    %c3_i32 = arith.constant 3 : i32
    %43 = arith.cmpi eq, %arg2, %c3_i32 : i32
    %c0_i32_33 = arith.constant 0 : i32
    %44 = arith.cmpi eq, %arg3, %c0_i32_33 : i32
    %45 = arith.andi %43, %44 : i1
    %46 = arith.extui %45 : i1 to i32
    %c0_i32_34 = arith.constant 0 : i32
    %47 = arith.cmpi ne, %46, %c0_i32_34 : i32
    scf.if %47 {
      %c0_35 = arith.constant 0 : index
      %c0_36 = arith.constant 0 : index
      %48 = vector.load %arg15[%c0_35, %c0_36] : memref<8x32xf32, #tpu.memory_space<vmem>>, vector<8x32xf32>
      %49 = vector.shape_cast %48 : vector<8x32xf32> to vector<1x8x32xf32>
      %c0_37 = arith.constant 0 : index
      %c0_38 = arith.constant 0 : index
      %c0_39 = arith.constant 0 : index
      %50 = vector.load %arg10[%c0_37, %c0_38, %c0_39] : memref<1x8x32xf32, #tpu.memory_space<vmem>>, vector<1x8x32xf32>
      tpu.vector_store %arg10[%c0_37, %c0_38, %c0_39], %49 {strides = array<i32>} : memref<1x8x32xf32, #tpu.memory_space<vmem>>, vector<1x8x32xf32>,
    } else {
    }
    return
  }
  func.func @transform_0(%arg0: i32, %arg1: i32, %arg2: i32, %arg3: i32) -> (i32, i32, i32) {
    %c0_i32 = arith.constant 0 : i32
    %c0_i32_0 = arith.constant 0 : i32
    return %arg0, %arg1, %c0_i32 : i32, i32, i32
  }
  func.func @transform_1(%arg0: i32, %arg1: i32, %arg2: i32, %arg3: i32) -> (i32, i32, i32) {
    %c0_i32 = arith.constant 0 : i32
    %c0_i32_0 = arith.constant 0 : i32
    return %arg0, %arg3, %c0_i32 : i32, i32, i32
  }
  func.func @transform_2(%arg0: i32, %arg1: i32, %arg2: i32, %arg3: i32) -> (i32, i32, i32) {
    %c0_i32 = arith.constant 0 : i32
    %c0_i32_0 = arith.constant 0 : i32
    %c0_i32_1 = arith.constant 0 : i32
    return %arg2, %c0_i32, %c0_i32_0 : i32, i32, i32
  }
  func.func @transform_3(%arg0: i32, %arg1: i32, %arg2: i32, %arg3: i32) -> (i32, i32, i32) {
    %c0_i32 = arith.constant 0 : i32
    %c0_i32_0 = arith.constant 0 : i32
    %c0_i32_1 = arith.constant 0 : i32
    return %arg2, %c0_i32, %c0_i32_0 : i32, i32, i32
  }
  func.func @transform_4(%arg0: i32, %arg1: i32, %arg2: i32, %arg3: i32) -> (i32, i32, i32) {
    %c0_i32 = arith.constant 0 : i32
    %c0_i32_0 = arith.constant 0 : i32
    %c0_i32_1 = arith.constant 0 : i32
    return %arg2, %c0_i32, %c0_i32_0 : i32, i32, i32
  }
  func.func @transform_5(%arg0: i32, %arg1: i32, %arg2: i32, %arg3: i32) -> (i32, i32, i32) {
    %c0_i32 = arith.constant 0 : i32
    %c0_i32_0 = arith.constant 0 : i32
    %c0_i32_1 = arith.constant 0 : i32
    return %arg2, %c0_i32, %c0_i32_0 : i32, i32, i32
  }
  func.func @transform_6(%arg0: i32, %arg1: i32, %arg2: i32, %arg3: i32) -> (i32, i32, i32) {
    %c0_i32 = arith.constant 0 : i32
    %c0_i32_0 = arith.constant 0 : i32
    return %arg0, %arg1, %c0_i32 : i32, i32, i32
  }
}

</mosaic_0001>

<llo_original>
// kernel: tpu_custom_call.1
$region0: #{tpu_custom_call.1}
  #allocation0 [shape = 'u32[]', space=smem, size = 0x4, offset = 0x4, fixed_abs, tag = 'smem constant byte address 0x4 - core index']
  #allocation1 [shape = 'u32[144,128]{1,0:T(1,128)}', space=vmem, size = 0x12000, scoped, tag = 'internal scratch']
  #allocation2 [shape = 'f32[8,8]{1,0:T(8,128)}', space=vmem, size = 0x1000, scoped, tag = 'scratch operand']
  #allocation3 [shape = 'f32[8,1]{1,0:T(8,128)}', space=vmem, size = 0x1000, scoped, tag = 'scratch operand']
  #allocation4 [shape = 'f32[8,1]{1,0:T(8,128)}', space=vmem, size = 0x1000, scoped, tag = 'scratch operand']
  #allocation5 [shape = 'f32[8,8]{1,0:T(8,128)}', space=vmem, size = 0x1000, scoped, tag = 'scratch operand']
  #allocation6 [shape = 'f32[8,32]{1,0:T(8,128)}', space=vmem, size = 0x1000, scoped, tag = 'scratch operand']
  %s0 = inlined_call_operand.vmem [shape: f32[2,8,32], index: 0, kind: input, shape index: {}]
  %s1 = inlined_call_operand.vmem [shape: f32[2,8,32], index: 1, kind: input, shape index: {}]
  %s2 = inlined_call_operand.vmem [shape: f32[4,32,8], index: 2, kind: input, shape index: {}]
  %s3 = inlined_call_operand.vmem [shape: f32[4,32,8], index: 3, kind: input, shape index: {}]
  %s4 = inlined_call_operand.vmem [shape: f32[4,32,8], index: 4, kind: input, shape index: {}]
  %s5 = inlined_call_operand.vmem [shape: f32[4,8,32], index: 5, kind: input, shape index: {}]
  %s6 = inlined_call_operand.hbm [shape: f32[2,8,32], index: 6, kind: output, shape index: {}]
  %s7 = sld [smem:[#allocation0]]
  $region73: #{tpu_custom_call.1} parent=0
    _
  %s9 = ssub.s32 1, %s7
  %s10 = scalar_select 0, %s9, %s7
  $region1: #{tpu_custom_call.1} parent=0
    #allocation7 [shape = 'u8[8192]{0}', space=vmem, size = 0x2000, scoped, tag = 'output window, operand 0']
    #allocation8 [shape = 's32[2]{0}', space=sflag, size = 0x8, scoped, tag = 'scoped memory for tpu_custom_call.1']
    %11 = vsyncpa [#allocation8], 0
    %s12 = scalar_lea.sflag [#allocation8], 1
    %13 = vsyncpa %s12, 0
    loop: start=0, step=1, limit=10
    $region2: #{tpu_custom_call.1} parent=1 // loop_pre_header
      _
    $region3: #{tpu_custom_call.1} parent=1 // loop_header
      %s15 = sphi 0, %s19
      %p16 = scmp.ge.s32.totalorder %s15, 10
      %s22 = sphi 0, %s48
      %s23 = sphi 0, %s44
      %s24 = sphi 0, %s40
      %s25 = sphi 0, %s36
      %s26 = sphi 0, %s22
      %s27 = sphi 0, %s23
      %s28 = sphi 0, %s24
      %s29 = sphi 0, %s25
      %s30 = sphi 0, %s26
      %s31 = sphi 0, %s27
      %s32 = sphi 0, %s28
      %s33 = sphi 0, %s29
      %s53 = sphi 0, %s55
      %s56 = sphi 0, %s53
      %s57 = sphi 0, %s56
      %s73 = sphi 0, %s57
      %s81 = sphi 0, %s83
      %s84 = sphi 0, %s81
      %s85 = sphi 0, %s84
      %s101 = sphi 0, %s85
      %s107 = sphi 0, %s109
      %s110 = sphi 0, %s107
      %s111 = sphi 0, %s110
      %s127 = sphi 0, %s111
      %s133 = sphi 0, %s135
      %s136 = sphi 0, %s133
      %s137 = sphi 0, %s136
      %s153 = sphi 0, %s137
      %s159 = sphi 0, %s161
      %s162 = sphi 0, %s159
      %s163 = sphi 0, %s162
      %s179 = sphi 0, %s163
      %s185 = sphi 0, %s187
      %s188 = sphi 0, %s185
      %s189 = sphi 0, %s188
      %s205 = sphi 0, %s189
      %s213 = sphi 0, %s215
      %s216 = sphi 0, %s213
      %s217 = sphi 0, %s216
      %s233 = sphi 0, %s217
    $region4: #{tpu_custom_call.1} parent=1 // loop_header_branch
      %18 = sbr.rel (%p16) target = $region8
    $region5: #{tpu_custom_call.1} parent=1 // loop_body
      %s20 = ssub.s32 %s15, 1
      %s21 = ssub.s32 %s15, 2
      %s34 = sadd.s32 1, %s25
      %p35 = scmp.ge.s32.totalorder %s34, 1
      %s36 = scalar_select %p35, 0, %s34
      %s37 = sadd.s32 1, %s24
      %s38 = scalar_select %p35, %s37, %s24
      %p39 = scmp.ge.s32.totalorder %s38, 4
      %s40 = scalar_select %p39, 0, %s38
      %s41 = sadd.s32 1, %s23
      %s42 = scalar_select %p39, %s41, %s23
      %p43 = scmp.ge.s32.totalorder %s42, 1
      %s44 = scalar_select %p43, 0, %s42
      %s45 = sadd.s32 1, %s22
      %s46 = scalar_select %p43, %s45, %s22
      %p47 = scmp.ge.s32.totalorder %s46, 2
      %s48 = scalar_select %p47, 0, %s46
      %s49 = ssub.s32 %s22, %s48
      %s50 = ssub.s32 %s23, %s44
      %s51 = sor.u32 %s49, %s50
      %p52 = scmp.eq.s32.totalorder %s51, 0
      %s54 = sadd.s32 %s53, 1
      %s55 = scalar_select %p52, %s53, %s54
      %p58 = pneg %p52
      %p59 = scmp.eq.s32.totalorder %s15, 7
      %p60 = por %p58, %p59
      %p61 = scmp.ne.s32.totalorder %s53, %s56
      %p62 = scmp.eq.s32.totalorder %s15, 0
      %p63 = por %p61, %p62
      %p64 = scmp.ne.s32.totalorder %s53, %s56
      %p65 = scmp.eq.s32.totalorder %s20, 7
      %p66 = por %p64, %p65
      %p67 = scmp.ne.s32.totalorder %s56, %s57
      %p68 = scmp.eq.s32.totalorder %s20, 0
      %p69 = por %p67, %p68
      %p70 = scmp.ne.s32.totalorder %s56, %s57
      %p71 = scmp.eq.s32.totalorder %s21, 7
      %p72 = por %p70, %p71
      %p74 = scmp.ne.s32.totalorder %s57, %s73
      %p75 = scmp.eq.s32.totalorder %s21, 0
      %p76 = por %p74, %p75
      %s77 = ssub.s32 %s22, %s48
      %s78 = ssub.s32 %s25, %s36
      %s79 = sor.u32 %s77, %s78
      %p80 = scmp.eq.s32.totalorder %s79, 0
      %s82 = sadd.s32 %s81, 1
      %s83 = scalar_select %p80, %s81, %s82
      %p86 = pneg %p80
      %p87 = scmp.eq.s32.totalorder %s15, 7
      %p88 = por %p86, %p87
      %p89 = scmp.ne.s32.totalorder %s81, %s84
      %p90 = scmp.eq.s32.totalorder %s15, 0
      %p91 = por %p89, %p90
      %p92 = scmp.ne.s32.totalorder %s81, %s84
      %p93 = scmp.eq.s32.totalorder %s20, 7
      %p94 = por %p92, %p93
      %p95 = scmp.ne.s32.totalorder %s84, %s85
      %p96 = scmp.eq.s32.totalorder %s20, 0
      %p97 = por %p95, %p96
      %p98 = scmp.ne.s32.totalorder %s84, %s85
      %p99 = scmp.eq.s32.totalorder %s21, 7
      %p100 = por %p98, %p99
      %p102 = scmp.ne.s32.totalorder %s85, %s101
      %p103 = scmp.eq.s32.totalorder %s21, 0
      %p104 = por %p102, %p103
      %s105 = ssub.s32 %s24, %s40
      %p106 = scmp.eq.s32.totalorder %s105, 0
      %s108 = sadd.s32 %s107, 1
      %s109 = scalar_select %p106, %s107, %s108
      %p112 = pneg %p106
      %p113 = scmp.eq.s32.totalorder %s15, 7
      %p114 = por %p112, %p113
      %p115 = scmp.ne.s32.totalorder %s107, %s110
      %p116 = scmp.eq.s32.totalorder %s15, 0
      %p117 = por %p115, %p116
      %p118 = scmp.ne.s32.totalorder %s107, %s110
      %p119 = scmp.eq.s32.totalorder %s20, 7
      %p120 = por %p118, %p119
      %p121 = scmp.ne.s32.totalorder %s110, %s111
      %p122 = scmp.eq.s32.totalorder %s20, 0
      %p123 = por %p121, %p122
      %p124 = scmp.ne.s32.totalorder %s110, %s111
      %p125 = scmp.eq.s32.totalorder %s21, 7
      %p126 = por %p124, %p125
      %p128 = scmp.ne.s32.totalorder %s111, %s127
      %p129 = scmp.eq.s32.totalorder %s21, 0
      %p130 = por %p128, %p129
      %s131 = ssub.s32 %s24, %s40
      %p132 = scmp.eq.s32.totalorder %s131, 0
      %s134 = sadd.s32 %s133, 1
      %s135 = scalar_select %p132, %s133, %s134
      %p138 = pneg %p132
      %p139 = scmp.eq.s32.totalorder %s15, 7
      %p140 = por %p138, %p139
      %p141 = scmp.ne.s32.totalorder %s133, %s136
      %p142 = scmp.eq.s32.totalorder %s15, 0
      %p143 = por %p141, %p142
      %p144 = scmp.ne.s32.totalorder %s133, %s136
      %p145 = scmp.eq.s32.totalorder %s20, 7
      %p146 = por %p144, %p145
      %p147 = scmp.ne.s32.totalorder %s136, %s137
      %p148 = scmp.eq.s32.totalorder %s20, 0
      %p149 = por %p147, %p148
      %p150 = scmp.ne.s32.totalorder %s136, %s137
      %p151 = scmp.eq.s32.totalorder %s21, 7
      %p152 = por %p150, %p151
      %p154 = scmp.ne.s32.totalorder %s137, %s153
      %p155 = scmp.eq.s32.totalorder %s21, 0
      %p156 = por %p154, %p155
      %s157 = ssub.s32 %s24, %s40
      %p158 = scmp.eq.s32.totalorder %s157, 0
      %s160 = sadd.s32 %s159, 1
      %s161 = scalar_select %p158, %s159, %s160
      %p164 = pneg %p158
      %p165 = scmp.eq.s32.totalorder %s15, 7
      %p166 = por %p164, %p165
      %p167 = scmp.ne.s32.totalorder %s159, %s162
      %p168 = scmp.eq.s32.totalorder %s15, 0
      %p169 = por %p167, %p168
      %p170 = scmp.ne.s32.totalorder %s159, %s162
      %p171 = scmp.eq.s32.totalorder %s20, 7
      %p172 = por %p170, %p171
      %p173 = scmp.ne.s32.totalorder %s162, %s163
      %p174 = scmp.eq.s32.totalorder %s20, 0
      %p175 = por %p173, %p174
      %p176 = scmp.ne.s32.totalorder %s162, %s163
      %p177 = scmp.eq.s32.totalorder %s21, 7
      %p178 = por %p176, %p177
      %p180 = scmp.ne.s32.totalorder %s163, %s179
      %p181 = scmp.eq.s32.totalorder %s21, 0
      %p182 = por %p180, %p181
      %s183 = ssub.s32 %s24, %s40
      %p184 = scmp.eq.s32.totalorder %s183, 0
      %s186 = sadd.s32 %s185, 1
      %s187 = scalar_select %p184, %s185, %s186
      %p190 = pneg %p184
      %p191 = scmp.eq.s32.totalorder %s15, 7
      %p192 = por %p190, %p191
      %p193 = scmp.ne.s32.totalorder %s185, %s188
      %p194 = scmp.eq.s32.totalorder %s15, 0
      %p195 = por %p193, %p194
      %p196 = scmp.ne.s32.totalorder %s185, %s188
      %p197 = scmp.eq.s32.totalorder %s20, 7
      %p198 = por %p196, %p197
      %p199 = scmp.ne.s32.totalorder %s188, %s189
      %p200 = scmp.eq.s32.totalorder %s20, 0
      %p201 = por %p199, %p200
      %p202 = scmp.ne.s32.totalorder %s188, %s189
      %p203 = scmp.eq.s32.totalorder %s21, 7
      %p204 = por %p202, %p203
      %p206 = scmp.ne.s32.totalorder %s189, %s205
      %p207 = scmp.eq.s32.totalorder %s21, 0
      %p208 = por %p206, %p207
      %s209 = ssub.s32 %s22, %s48
      %s210 = ssub.s32 %s23, %s44
      %s211 = sor.u32 %s209, %s210
      %p212 = scmp.eq.s32.totalorder %s211, 0
      %s214 = sadd.s32 %s213, 1
      %s215 = scalar_select %p212, %s213, %s214
      %p218 = pneg %p212
      %p219 = scmp.eq.s32.totalorder %s15, 7
      %p220 = por %p218, %p219
      %p221 = scmp.ne.s32.totalorder %s213, %s216
      %p222 = scmp.eq.s32.totalorder %s15, 0
      %p223 = por %p221, %p222
      %p224 = scmp.ne.s32.totalorder %s213, %s216
      %p225 = scmp.eq.s32.totalorder %s20, 7
      %p226 = por %p224, %p225
      %p227 = scmp.ne.s32.totalorder %s216, %s217
      %p228 = scmp.eq.s32.totalorder %s20, 0
      %p229 = por %p227, %p228
      %p230 = scmp.ne.s32.totalorder %s216, %s217
      %p231 = scmp.eq.s32.totalorder %s21, 7
      %p232 = por %p230, %p231
      %p234 = scmp.ne.s32.totalorder %s217, %s233
      %p235 = scmp.eq.s32.totalorder %s21, 0
      %p236 = por %p234, %p235
      %p237 = scmp.le.s32.totalorder 1, %s15
      %p238 = scmp.lt.s32.totalorder %s15, 9
      %p239 = pnand %p237, %p238
      %p240 = pneg %p239
      // Predicated region
      $region9: #{tpu_custom_call.1} parent=5 // pred_check
        _
      $region10: #{tpu_custom_call.1} parent=5 // pred_check_branch
        %242 = sbr.rel (%p239) target = $region12
      $region11: #{tpu_custom_call.1} parent=5 // pred_region
        %s243 = ssub.s32 %s15, 1
      $region12: #{tpu_custom_call.1} parent=5 // pred_fallthru
        _
      %p244 = scmp.lt.s32.totalorder %s15, 8
      // Predicated region
      $region13: #{tpu_custom_call.1} parent=5 // pred_check
        %p245 = pneg %p244
      $region14: #{tpu_custom_call.1} parent=5 // pred_check_branch
        %247 = sbr.rel (%p245) target = $region16
      $region15: #{tpu_custom_call.1} parent=5 // pred_region
        // Predicated region
        $region17: #{tpu_custom_call.1} parent=15 // pred_check
          %p248 = pneg %p63
        $region18: #{tpu_custom_call.1} parent=15 // pred_check_branch
          %250 = sbr.rel (%p248) target = $region20
        $region19: #{tpu_custom_call.1} parent=15 // pred_region
          %p251 = scmp.lt.s32.totalorder %s22, 1
          %s252 = scalar_select %p251, %s22, 1
          %p253 = scmp.lt.s32.totalorder %s23, 0
          %s254 = scalar_select %p253, %s23, 0
          %s255 = sadd.s32 %s254, %s252
          %s256 = smul.addr %s255, 8
          %s257 = scalar_lea.vmem %s0, %s256
        $region20: #{tpu_custom_call.1} parent=15 // pred_fallthru
          _
        // Predicated region
        $region21: #{tpu_custom_call.1} parent=15 // pred_check
          %p258 = pneg %p91
        $region22: #{tpu_custom_call.1} parent=15 // pred_check_branch
          %260 = sbr.rel (%p258) target = $region24
        $region23: #{tpu_custom_call.1} parent=15 // pred_region
          %p261 = scmp.lt.s32.totalorder %s22, 1
          %s262 = scalar_select %p261, %s22, 1
          %p263 = scmp.lt.s32.totalorder %s25, 0
          %s264 = scalar_select %p263, %s25, 0
          %s265 = sadd.s32 %s264, %s262
          %s266 = smul.addr %s265, 8
          %s267 = scalar_lea.vmem %s1, %s266
        $region24: #{tpu_custom_call.1} parent=15 // pred_fallthru
          _
        // Predicated region
        $region25: #{tpu_custom_call.1} parent=15 // pred_check
          %p268 = pneg %p117
        $region26: #{tpu_custom_call.1} parent=15 // pred_check_branch
          %270 = sbr.rel (%p268) target = $region28
        $region27: #{tpu_custom_call.1} parent=15 // pred_region
          %p271 = scmp.lt.s32.totalorder %s24, 3
          %s272 = scalar_select %p271, %s24, 3
          %s273 = smul.addr %s272, 4
          %s274 = smul.addr %s273, 8
          %s275 = scalar_lea.vmem %s2, %s274
        $region28: #{tpu_custom_call.1} parent=15 // pred_fallthru
          _
        // Predicated region
        $region29: #{tpu_custom_call.1} parent=15 // pred_check
          %p276 = pneg %p143
        $region30: #{tpu_custom_call.1} parent=15 // pred_check_branch
          %278 = sbr.rel (%p276) target = $region32
        $region31: #{tpu_custom_call.1} parent=15 // pred_region
          %p279 = scmp.lt.s32.totalorder %s24, 3
          %s280 = scalar_select %p279, %s24, 3
          %s281 = smul.addr %s280, 4
          %s282 = smul.addr %s281, 8
          %s283 = scalar_lea.vmem %s3, %s282
        $region32: #{tpu_custom_call.1} parent=15 // pred_fallthru
          _
        // Predicated region
        $region33: #{tpu_custom_call.1} parent=15 // pred_check
          %p284 = pneg %p169
        $region34: #{tpu_custom_call.1} parent=15 // pred_check_branch
          %286 = sbr.rel (%p284) target = $region36
        $region35: #{tpu_custom_call.1} parent=15 // pred_region
          %p287 = scmp.lt.s32.totalorder %s24, 3
          %s288 = scalar_select %p287, %s24, 3
          %s289 = smul.addr %s288, 4
          %s290 = smul.addr %s289, 8
          %s291 = scalar_lea.vmem %s4, %s290
        $region36: #{tpu_custom_call.1} parent=15 // pred_fallthru
          _
        // Predicated region
        $region37: #{tpu_custom_call.1} parent=15 // pred_check
          %p292 = pneg %p195
        $region38: #{tpu_custom_call.1} parent=15 // pred_check_branch
          %294 = sbr.rel (%p292) target = $region40
        $region39: #{tpu_custom_call.1} parent=15 // pred_region
          %p295 = scmp.lt.s32.totalorder %s24, 3
          %s296 = scalar_select %p295, %s24, 3
          %s297 = smul.addr %s296, 8
          %s298 = scalar_lea.vmem %s5, %s297
        $region40: #{tpu_custom_call.1} parent=15 // pred_fallthru
          _
      $region16: #{tpu_custom_call.1} parent=5 // pred_fallthru
        _
      %p299 = scmp.le.s32.totalorder 1, %s15
      %p300 = scmp.lt.s32.totalorder %s15, 9
      %p301 = pnand %p299, %p300
      %p302 = pneg %p301
      // Predicated region
      $region41: #{tpu_custom_call.1} parent=5 // pred_check
        _
      $region42: #{tpu_custom_call.1} parent=5 // pred_check_branch
        %304 = sbr.rel (%p301) target = $region44
      $region43: #{tpu_custom_call.1} parent=5 // pred_region
        %s305 = ssub.s32 %s15, 1
        %p306 = scmp.lt.s32.totalorder %s26, 1
        %s307 = scalar_select %p306, %s26, 1
        %p308 = scmp.lt.s32.totalorder %s27, 0
        %s309 = scalar_select %p308, %s27, 0
        %s310 = sadd.s32 %s309, %s307
        %s311 = smul.addr %s310, 8
        %s312 = scalar_lea.vmem %s0, %s311
        %p313 = pneg %p69
        %p314 = pneg %p66
        %p315 = scmp.lt.s32.totalorder %s26, 1
        %s316 = scalar_select %p315, %s26, 1
        %p317 = scmp.lt.s32.totalorder %s29, 0
        %s318 = scalar_select %p317, %s29, 0
        %s319 = sadd.s32 %s318, %s316
        %s320 = smul.addr %s319, 8
        %s321 = scalar_lea.vmem %s1, %s320
        %p322 = pneg %p97
        %p323 = pneg %p94
        %p324 = scmp.lt.s32.totalorder %s28, 3
        %s325 = scalar_select %p324, %s28, 3
        %s326 = smul.addr %s325, 4
        %s327 = smul.addr %s326, 8
        %s328 = scalar_lea.vmem %s2, %s327
        %p329 = pneg %p123
        %p330 = pneg %p120
        %p331 = scmp.lt.s32.totalorder %s28, 3
        %s332 = scalar_select %p331, %s28, 3
        %s333 = smul.addr %s332, 4
        %s334 = smul.addr %s333, 8
        %s335 = scalar_lea.vmem %s3, %s334
        %p336 = pneg %p149
        %p337 = pneg %p146
        %p338 = scmp.lt.s32.totalorder %s28, 3
        %s339 = scalar_select %p338, %s28, 3
        %s340 = smul.addr %s339, 4
        %s341 = smul.addr %s340, 8
        %s342 = scalar_lea.vmem %s4, %s341
        %p343 = pneg %p175
        %p344 = pneg %p172
        %p345 = scmp.lt.s32.totalorder %s28, 3
        %s346 = scalar_select %p345, %s28, 3
        %s347 = smul.addr %s346, 8
        %s348 = scalar_lea.vmem %s5, %s347
        %p349 = pneg %p201
        %p350 = pneg %p198
        %p351 = pneg %p229
        %p352 = pneg %p226
        %s353 = sand.u32 %s216, 1
        %s354 = scalar_lea.sflag [#allocation8], %s353
        %s355 = sand.u32 %s216, 1
        %s356 = smul.addr %s355, 8
        %s357 = scalar_lea.vmem [#allocation7], %s356
        %p358 = scmp.lt.s32.totalorder %s26, 1
        %s359 = scalar_select %p358, %s26, 1
        %p360 = scmp.lt.s32.totalorder %s27, 0
        %s361 = scalar_select %p360, %s27, 0
        %s362 = sadd.s32 %s361, %s359
        %s363 = smul.addr %s362, 8
        %s364 = scalar_lea.vmem %s0, %s363
        %p365 = scmp.lt.s32.totalorder %s26, 1
        %s366 = scalar_select %p365, %s26, 1
        %p367 = scmp.lt.s32.totalorder %s29, 0
        %s368 = scalar_select %p367, %s29, 0
        %s369 = sadd.s32 %s368, %s366
        %s370 = smul.addr %s369, 8
        %s371 = scalar_lea.vmem %s1, %s370
        %p372 = scmp.lt.s32.totalorder %s28, 3
        %s373 = scalar_select %p372, %s28, 3
        %s374 = smul.addr %s373, 4
        %s375 = smul.addr %s374, 8
        %s376 = scalar_lea.vmem %s2, %s375
        %p377 = scmp.lt.s32.totalorder %s28, 3
        %s378 = scalar_select %p377, %s28, 3
        %s379 = smul.addr %s378, 4
        %s380 = smul.addr %s379, 8
        %s381 = scalar_lea.vmem %s3, %s380
        %p382 = scmp.lt.s32.totalorder %s28, 3
        %s383 = scalar_select %p382, %s28, 3
        %s384 = smul.addr %s383, 4
        %s385 = smul.addr %s384, 8
        %s386 = scalar_lea.vmem %s4, %s385
        %p387 = scmp.lt.s32.totalorder %s28, 3
        %s388 = scalar_select %p387, %s28, 3
        %s389 = smul.addr %s388, 8
        %s390 = scalar_lea.vmem %s5, %s389
        %p391 = scmp.eq.s32.totalorder %s28, 0
        %p392 = scmp.eq.s32.totalorder %s29, 0
        %p393 = pnand %p391, %p392
        %p394 = pneg %p393
        // Predicated region
        $region45: #{tpu_custom_call.1} parent=43 // pred_check
          _
        $region46: #{tpu_custom_call.1} parent=43 // pred_check_branch
          %396 = sbr.rel (%p393) target = $region48
        $region47: #{tpu_custom_call.1} parent=43 // pred_region
          %vm397 = vcmask 261120
          %398 = vst.msk [vmem:[#allocation6] sm:$0xff] %vm397, 0.0
        $region48: #{tpu_custom_call.1} parent=43 // pred_fallthru
          _
        // Predicated region
        $region49: #{tpu_custom_call.1} parent=43 // pred_check
          %p399 = pneg %p392
        $region50: #{tpu_custom_call.1} parent=43 // pred_check_branch
          %401 = sbr.rel (%p399) target = $region52
        $region51: #{tpu_custom_call.1} parent=43 // pred_region
          %v402 = vld [vmem:[%s364] sm:$0xff]
          %v403 = vld [vmem:[%s376] sm:$0xff]
          %v404 = vld [vmem:[%s376 + $0x8] sm:$0xff]
          %v405 = vld [vmem:[%s376 + $0x10] sm:$0xff]
          %v406 = vld [vmem:[%s376 + $0x18] sm:$0xff]
          %vm407 = vcmask 261120
          %v409 = vsel %vm407, %v402, 0
          %411 = vmatprep.subr.mxu0 0.0
          %412 = vmatpush1.msra.mxu0 0.0
          %413 = vmatprep.subr.mxu0 0.0
          %414 = vmatpush1.msra.mxu0 0.0
          %415 = vmatprep.subr.mxu0 0.0
          %416 = vmatpush1.msra.mxu0 0.0
          %417 = vmatprep.subr.mxu0 0.0
          %418 = vmatpush1.msra.mxu0 0.0
          %419 = vmatprep.subr.mxu0 0.0
          %420 = vmatpush1.msra.mxu0 0.0
          %421 = vmatprep.subr.mxu0 0.0
          %422 = vmatpush1.msra.mxu0 0.0
          %423 = vmatprep.subr.mxu0 0.0
          %424 = vmatpush1.msra.mxu0 0.0
          %425 = vmatprep.subr.mxu0 0.0
          %426 = vmatpush1.msra.mxu0 0.0
          %427 = vmatprep.subr.mxu0 0.0
          %428 = vmatpush1.msra.mxu0 0.0
          %429 = vmatprep.subr.mxu0 0.0
          %430 = vmatpush1.msra.mxu0 0.0
          %431 = vmatprep.subr.mxu0 0.0
          %432 = vmatpush1.msra.mxu0 0.0
          %433 = vmatprep.subr.mxu0 0.0
          %434 = vmatpush1.msra.mxu0 0.0
          %435 = vmatprep.subr.mxu0 0.0
          %436 = vmatpush1.msra.mxu0 %v406
          %437 = vmatprep.subr.mxu0 0.0
          %438 = vmatpush1.msra.mxu0 %v405
          %439 = vmatprep.subr.mxu0 0.0
          %440 = vmatpush1.msra.mxu0 %v404
          %441 = vmatprep.subr.mxu0 0.0
          %442 = vmatpush1.msra.mxu0 %v403
          %443 = vmatprep.subr.mxu0 0.0
          %444 = vmatpush2.msra.mxu0 0.0
          %445 = vmatprep.subr.mxu0 0.0
          %446 = vmatpush2.msra.mxu0 0.0
          %447 = vmatprep.subr.mxu0 0.0
          %448 = vmatpush2.msra.mxu0 0.0
          %449 = vmatprep.subr.mxu0 0.0
          %450 = vmatpush2.msra.mxu0 0.0
          %451 = vmatprep.subr.mxu0 0.0
          %452 = vmatpush2.msra.mxu0 0.0
          %453 = vmatprep.subr.mxu0 0.0
          %454 = vmatpush2.msra.mxu0 0.0
          %455 = vmatprep.subr.mxu0 0.0
          %456 = vmatpush2.msra.mxu0 0.0
          %457 = vmatprep.subr.mxu0 0.0
          %458 = vmatpush2.msra.mxu0 0.0
          %459 = vmatprep.subr.mxu0 0.0
          %460 = vmatpush2.msra.mxu0 0.0
          %461 = vmatprep.subr.mxu0 0.0
          %462 = vmatpush2.msra.mxu0 0.0
          %463 = vmatprep.subr.mxu0 0.0
          %464 = vmatpush2.msra.mxu0 0.0
          %465 = vmatprep.subr.mxu0 0.0
          %466 = vmatpush2.msra.mxu0 0.0
          %467 = vmatprep.subr.mxu0 0.0
          %468 = vmatpush2.msra.mxu0 0.0
          %469 = vmatprep.subr.mxu0 0.0
          %470 = vmatpush2.msra.mxu0 0.0
          %471 = vmatprep.subr.mxu0 0.0
          %472 = vmatpush2.msra.mxu0 0.0
          %473 = vmatprep.subr.mxu0 0.0
          %474 = vmatpush2.msra.mxu0 0.0
          %475 = vmatprep.mubr.f32.mxu0 0.0
          %476 = vmatmul.mubr.f32.gmra.mxu0 %v409
          %v477 = vpop.f32.mrf.mxu0
          %v478 = vadd.f32 0.0, %v477
          %v479 = vpop.f32.mrf.mxu0
          %480 = vdwg.mxu0
          %vm481 = vcmask 64512
          %482 = vst.msk [vmem:[#allocation2] sm:$0xff] %vm481, %v478
          %vm483 = vcmask 7168
          %484 = vst.msk [vmem:[#allocation3] sm:$0xff] %vm483, -inf
          %485 = vst.msk [vmem:[#allocation4] sm:$0xff] %vm483, 0.0
          %486 = vst.msk [vmem:[#allocation5] sm:$0xff] %vm481, 0.0
        $region52: #{tpu_custom_call.1} parent=43 // pred_fallthru
          _
        %v487 = vld [vmem:[%s371] sm:$0xff]
        %v488 = vld [vmem:[%s381] sm:$0xff]
        %v489 = vld [vmem:[%s381 + $0x8] sm:$0xff]
        %v490 = vld [vmem:[%s381 + $0x10] sm:$0xff]
        %v491 = vld [vmem:[%s381 + $0x18] sm:$0xff]
        %vm492 = vcmask 261120
        %v494 = vsel %vm492, %v487, 0
        %496 = vmatprep.subr.mxu0 0.0
        %497 = vmatpush1.msra.mxu0 0.0
        %498 = vmatprep.subr.mxu0 0.0
        %499 = vmatpush1.msra.mxu0 0.0
        %500 = vmatprep.subr.mxu0 0.0
        %501 = vmatpush1.msra.mxu0 0.0
        %502 = vmatprep.subr.mxu0 0.0
        %503 = vmatpush1.msra.mxu0 0.0
        %504 = vmatprep.subr.mxu0 0.0
        %505 = vmatpush1.msra.mxu0 0.0
        %506 = vmatprep.subr.mxu0 0.0
        %507 = vmatpush1.msra.mxu0 0.0
        %508 = vmatprep.subr.mxu0 0.0
        %509 = vmatpush1.msra.mxu0 0.0
        %510 = vmatprep.subr.mxu0 0.0
        %511 = vmatpush1.msra.mxu0 0.0
        %512 = vmatprep.subr.mxu0 0.0
        %513 = vmatpush1.msra.mxu0 0.0
        %514 = vmatprep.subr.mxu0 0.0
        %515 = vmatpush1.msra.mxu0 0.0
        %516 = vmatprep.subr.mxu0 0.0
        %517 = vmatpush1.msra.mxu0 0.0
        %518 = vmatprep.subr.mxu0 0.0
        %519 = vmatpush1.msra.mxu0 0.0
        %520 = vmatprep.subr.mxu0 0.0
        %521 = vmatpush1.msra.mxu0 %v491
        %522 = vmatprep.subr.mxu0 0.0
        %523 = vmatpush1.msra.mxu0 %v490
        %524 = vmatprep.subr.mxu0 0.0
        %525 = vmatpush1.msra.mxu0 %v489
        %526 = vmatprep.subr.mxu0 0.0
        %527 = vmatpush1.msra.mxu0 %v488
        %528 = vmatprep.subr.mxu0 0.0
        %529 = vmatpush2.msra.mxu0 0.0
        %530 = vmatprep.subr.mxu0 0.0
        %531 = vmatpush2.msra.mxu0 0.0
        %532 = vmatprep.subr.mxu0 0.0
        %533 = vmatpush2.msra.mxu0 0.0
        %534 = vmatprep.subr.mxu0 0.0
        %535 = vmatpush2.msra.mxu0 0.0
        %536 = vmatprep.subr.mxu0 0.0
        %537 = vmatpush2.msra.mxu0 0.0
        %538 = vmatprep.subr.mxu0 0.0
        %539 = vmatpush2.msra.mxu0 0.0
        %540 = vmatprep.subr.mxu0 0.0
        %541 = vmatpush2.msra.mxu0 0.0
        %542 = vmatprep.subr.mxu0 0.0
        %543 = vmatpush2.msra.mxu0 0.0
        %544 = vmatprep.subr.mxu0 0.0
        %545 = vmatpush2.msra.mxu0 0.0
        %546 = vmatprep.subr.mxu0 0.0
        %547 = vmatpush2.msra.mxu0 0.0
        %548 = vmatprep.subr.mxu0 0.0
        %549 = vmatpush2.msra.mxu0 0.0
        %550 = vmatprep.subr.mxu0 0.0
        %551 = vmatpush2.msra.mxu0 0.0
        %552 = vmatprep.subr.mxu0 0.0
        %553 = vmatpush2.msra.mxu0 0.0
        %554 = vmatprep.subr.mxu0 0.0
        %555 = vmatpush2.msra.mxu0 0.0
        %556 = vmatprep.subr.mxu0 0.0
        %557 = vmatpush2.msra.mxu0 0.0
        %558 = vmatprep.subr.mxu0 0.0
        %559 = vmatpush2.msra.mxu0 0.0
        %560 = vmatprep.mubr.f32.mxu0 0.0
        %561 = vmatmul.mubr.f32.gmra.mxu0 %v494
        %v562 = vpop.f32.mrf.mxu0
        %v563 = vadd.f32 0.0, %v562
        %v564 = vpop.f32.mrf.mxu0
        %565 = vdwg.mxu0
        %v566 = vld [vmem:[%s386] sm:$0xff]
        %v567 = vld [vmem:[%s386 + $0x8] sm:$0xff]
        %v568 = vld [vmem:[%s386 + $0x10] sm:$0xff]
        %v569 = vld [vmem:[%s386 + $0x18] sm:$0xff]
        %570 = vmatprep.subr.mxu0 0.0
        %571 = vmatpush1.msra.mxu0 0.0
        %572 = vmatprep.subr.mxu0 0.0
        %573 = vmatpush1.msra.mxu0 0.0
        %574 = vmatprep.subr.mxu0 0.0
        %575 = vmatpush1.msra.mxu0 0.0
        %576 = vmatprep.subr.mxu0 0.0
        %577 = vmatpush1.msra.mxu0 0.0
        %578 = vmatprep.subr.mxu0 0.0
        %579 = vmatpush1.msra.mxu0 0.0
        %580 = vmatprep.subr.mxu0 0.0
        %581 = vmatpush1.msra.mxu0 0.0
        %582 = vmatprep.subr.mxu0 0.0
        %583 = vmatpush1.msra.mxu0 0.0
        %584 = vmatprep.subr.mxu0 0.0
        %585 = vmatpush1.msra.mxu0 0.0
        %586 = vmatprep.subr.mxu0 0.0
        %587 = vmatpush1.msra.mxu0 0.0
        %588 = vmatprep.subr.mxu0 0.0
        %589 = vmatpush1.msra.mxu0 0.0
        %590 = vmatprep.subr.mxu0 0.0
        %591 = vmatpush1.msra.mxu0 0.0
        %592 = vmatprep.subr.mxu0 0.0
        %593 = vmatpush1.msra.mxu0 0.0
        %594 = vmatprep.subr.mxu0 0.0
        %595 = vmatpush1.msra.mxu0 %v569
        %596 = vmatprep.subr.mxu0 0.0
        %597 = vmatpush1.msra.mxu0 %v568
        %598 = vmatprep.subr.mxu0 0.0
        %599 = vmatpush1.msra.mxu0 %v567
        %600 = vmatprep.subr.mxu0 0.0
        %601 = vmatpush1.msra.mxu0 %v566
        %602 = vmatprep.subr.mxu0 0.0
        %603 = vmatpush2.msra.mxu0 0.0
        %604 = vmatprep.subr.mxu0 0.0
        %605 = vmatpush2.msra.mxu0 0.0
        %606 = vmatprep.subr.mxu0 0.0
        %607 = vmatpush2.msra.mxu0 0.0
        %608 = vmatprep.subr.mxu0 0.0
        %609 = vmatpush2.msra.mxu0 0.0
        %610 = vmatprep.subr.mxu0 0.0
        %611 = vmatpush2.msra.mxu0 0.0
        %612 = vmatprep.subr.mxu0 0.0
        %613 = vmatpush2.msra.mxu0 0.0
        %614 = vmatprep.subr.mxu0 0.0
        %615 = vmatpush2.msra.mxu0 0.0
        %616 = vmatprep.subr.mxu0 0.0
        %617 = vmatpush2.msra.mxu0 0.0
        %618 = vmatprep.subr.mxu0 0.0
        %619 = vmatpush2.msra.mxu0 0.0
        %620 = vmatprep.subr.mxu0 0.0
        %621 = vmatpush2.msra.mxu0 0.0
        %622 = vmatprep.subr.mxu0 0.0
        %623 = vmatpush2.msra.mxu0 0.0
        %624 = vmatprep.subr.mxu0 0.0
        %625 = vmatpush2.msra.mxu0 0.0
        %626 = vmatprep.subr.mxu0 0.0
        %627 = vmatpush2.msra.mxu0 0.0
        %628 = vmatprep.subr.mxu0 0.0
        %629 = vmatpush2.msra.mxu0 0.0
        %630 = vmatprep.subr.mxu0 0.0
        %631 = vmatpush2.msra.mxu0 0.0
        %632 = vmatprep.subr.mxu0 0.0
        %633 = vmatpush2.msra.mxu0 0.0
        %634 = vmatprep.mubr.f32.mxu0 0.0
        %635 = vmatmul.mubr.f32.gmra.mxu0 %v494
        %v636 = vpop.f32.mrf.mxu0
        %v637 = vadd.f32 0.0, %v636
        %v638 = vpop.f32.mrf.mxu0
        %639 = vdwg.mxu0
        %v640 = vld [vmem:[#allocation2] sm:$0xff]
        %vm641 = vcmask 64512
        %v643 = vsel %vm641, %v640, 0
        %v646 = vsel %vm641, %v563, 0
        %648 = vmatprep.subr.mxu0 0.0
        %649 = vmatpush1.xpose.msra.mxu0 0.0
        %650 = vmatprep.subr.mxu0 0.0
        %651 = vmatpush1.xpose.msra.mxu0 0.0
        %652 = vmatprep.subr.mxu0 0.0
        %653 = vmatpush1.xpose.msra.mxu0 0.0
        %654 = vmatprep.subr.mxu0 0.0
        %655 = vmatpush1.xpose.msra.mxu0 0.0
        %656 = vmatprep.subr.mxu0 0.0
        %657 = vmatpush1.xpose.msra.mxu0 0.0
        %658 = vmatprep.subr.mxu0 0.0
        %659 = vmatpush1.xpose.msra.mxu0 0.0
        %660 = vmatprep.subr.mxu0 0.0
        %661 = vmatpush1.xpose.msra.mxu0 0.0
        %662 = vmatprep.subr.mxu0 0.0
        %663 = vmatpush1.xpose.msra.mxu0 0.0
        %664 = vmatprep.subr.mxu0 0.0
        %665 = vmatpush1.xpose.msra.mxu0 0.0
        %666 = vmatprep.subr.mxu0 0.0
        %667 = vmatpush1.xpose.msra.mxu0 0.0
        %668 = vmatprep.subr.mxu0 0.0
        %669 = vmatpush1.xpose.msra.mxu0 0.0
        %670 = vmatprep.subr.mxu0 0.0
        %671 = vmatpush1.xpose.msra.mxu0 0.0
        %672 = vmatprep.subr.mxu0 0.0
        %673 = vmatpush1.xpose.msra.mxu0 0.0
        %674 = vmatprep.subr.mxu0 0.0
        %675 = vmatpush1.xpose.msra.mxu0 0.0
        %676 = vmatprep.subr.mxu0 0.0
        %677 = vmatpush1.xpose.msra.mxu0 0.0
        %678 = vmatprep.subr.mxu0 0.0
        %679 = vmatpush1.xpose.msra.mxu0 %v646
        %680 = vmatprep.subr.mxu0 0.0
        %681 = vmatpush2.xpose.msra.mxu0 0.0
        %682 = vmatprep.subr.mxu0 0.0
        %683 = vmatpush2.xpose.msra.mxu0 0.0
        %684 = vmatprep.subr.mxu0 0.0
        %685 = vmatpush2.xpose.msra.mxu0 0.0
        %686 = vmatprep.subr.mxu0 0.0
        %687 = vmatpush2.xpose.msra.mxu0 0.0
        %688 = vmatprep.subr.mxu0 0.0
        %689 = vmatpush2.xpose.msra.mxu0 0.0
        %690 = vmatprep.subr.mxu0 0.0
        %691 = vmatpush2.xpose.msra.mxu0 0.0
        %692 = vmatprep.subr.mxu0 0.0
        %693 = vmatpush2.xpose.msra.mxu0 0.0
        %694 = vmatprep.subr.mxu0 0.0
        %695 = vmatpush2.xpose.msra.mxu0 0.0
        %696 = vmatprep.subr.mxu0 0.0
        %697 = vmatpush2.xpose.msra.mxu0 0.0
        %698 = vmatprep.subr.mxu0 0.0
        %699 = vmatpush2.xpose.msra.mxu0 0.0
        %700 = vmatprep.subr.mxu0 0.0
        %701 = vmatpush2.xpose.msra.mxu0 0.0
        %702 = vmatprep.subr.mxu0 0.0
        %703 = vmatpush2.xpose.msra.mxu0 0.0
        %704 = vmatprep.subr.mxu0 0.0
        %705 = vmatpush2.xpose.msra.mxu0 0.0
        %706 = vmatprep.subr.mxu0 0.0
        %707 = vmatpush2.xpose.msra.mxu0 0.0
        %708 = vmatprep.subr.mxu0 0.0
        %709 = vmatpush2.xpose.msra.mxu0 0.0
        %710 = vmatprep.subr.mxu0 0.0
        %711 = vmatpush2.xpose.msra.mxu0 0.0
        %712 = vmatprep.mubr.f32.mxu0 0.0
        %713 = vmatmul.mubr.f32.gmra.mxu0 %v643
        %v714 = vpop.f32.mrf.mxu0
        %v715 = vadd.f32 0.0, %v714
        %v716 = vpop.f32.mrf.mxu0
        %717 = vdwg.mxu0
        %v718 = vld [vmem:[#allocation3] sm:$0xff]
        %v719 = vsel %vm641, %v715, -inf
        %720 = vmax.xlane.f32.xlu0 %v719
        %v721 = vpop.xlane.xlu0 %720
        %v722 = vmax.f32 %v718, %v721
        %v723 = vsub.f32 %v718, %v722
        %v724 = vmul.f32 %v723, 1.442695
        %v725 = vpow.pop %v724
        %727 = vset.pattern.permute.xlu0 0
        %728 = vperm.xlu0 %727, %v722
        %v729 = vpop.permute.xlu0 %728
        %v731 = vsub.f32 %v715, %v729
        %v732 = vmul.f32 %v731, 1.442695
        %v733 = vpow.pop %v732
        %v734 = vld [vmem:[#allocation4] sm:$0xff]
        %v735 = vmul.f32 %v725, %v734
        %v736 = vsel %vm641, %v733, 0.0
        %737 = vadd.xlane.f32.xlu0 %v736
        %v738 = vpop.xlane.xlu0 %737
        %v739 = vadd.f32 %v735, %v738
        %vm740 = vcmask 7168
        %741 = vst.msk [vmem:[#allocation4] sm:$0xff] %vm740, %v739
        %v742 = vld [vmem:[#allocation5] sm:$0xff]
        %744 = vset.pattern.permute.xlu0 0
        %745 = vperm.xlu0 %744, %v725
        %v746 = vpop.permute.xlu0 %745
        %v748 = vmul.f32 %v746, %v742
        %v750 = vsel %vm641, %v733, 0
        %752 = vmatprep.subr.mxu0 0.0
        %753 = vmatpush1.msra.mxu0 0.0
        %754 = vmatprep.subr.mxu0 0.0
        %755 = vmatpush1.msra.mxu0 0.0
        %756 = vmatprep.subr.mxu0 0.0
        %757 = vmatpush1.msra.mxu0 0.0
        %758 = vmatprep.subr.mxu0 0.0
        %759 = vmatpush1.msra.mxu0 0.0
        %760 = vmatprep.subr.mxu0 0.0
        %761 = vmatpush1.msra.mxu0 0.0
        %762 = vmatprep.subr.mxu0 0.0
        %763 = vmatpush1.msra.mxu0 0.0
        %764 = vmatprep.subr.mxu0 0.0
        %765 = vmatpush1.msra.mxu0 0.0
        %766 = vmatprep.subr.mxu0 0.0
        %767 = vmatpush1.msra.mxu0 0.0
        %768 = vmatprep.subr.mxu0 0.0
        %769 = vmatpush1.msra.mxu0 0.0
        %770 = vmatprep.subr.mxu0 0.0
        %771 = vmatpush1.msra.mxu0 0.0
        %772 = vmatprep.subr.mxu0 0.0
        %773 = vmatpush1.msra.mxu0 0.0
        %774 = vmatprep.subr.mxu0 0.0
        %775 = vmatpush1.msra.mxu0 0.0
        %776 = vmatprep.subr.mxu0 0.0
        %777 = vmatpush1.msra.mxu0 0.0
        %778 = vmatprep.subr.mxu0 0.0
        %779 = vmatpush1.msra.mxu0 0.0
        %780 = vmatprep.subr.mxu0 0.0
        %781 = vmatpush1.msra.mxu0 0.0
        %782 = vmatprep.subr.mxu0 0.0
        %783 = vmatpush1.msra.mxu0 %v637
        %784 = vmatprep.subr.mxu0 0.0
        %785 = vmatpush2.msra.mxu0 0.0
        %786 = vmatprep.subr.mxu0 0.0
        %787 = vmatpush2.msra.mxu0 0.0
        %788 = vmatprep.subr.mxu0 0.0
        %789 = vmatpush2.msra.mxu0 0.0
        %790 = vmatprep.subr.mxu0 0.0
        %791 = vmatpush2.msra.mxu0 0.0
        %792 = vmatprep.subr.mxu0 0.0
        %793 = vmatpush2.msra.mxu0 0.0
        %794 = vmatprep.subr.mxu0 0.0
        %795 = vmatpush2.msra.mxu0 0.0
        %796 = vmatprep.subr.mxu0 0.0
        %797 = vmatpush2.msra.mxu0 0.0
        %798 = vmatprep.subr.mxu0 0.0
        %799 = vmatpush2.msra.mxu0 0.0
        %800 = vmatprep.subr.mxu0 0.0
        %801 = vmatpush2.msra.mxu0 0.0
        %802 = vmatprep.subr.mxu0 0.0
        %803 = vmatpush2.msra.mxu0 0.0
        %804 = vmatprep.subr.mxu0 0.0
        %805 = vmatpush2.msra.mxu0 0.0
        %806 = vmatprep.subr.mxu0 0.0
        %807 = vmatpush2.msra.mxu0 0.0
        %808 = vmatprep.subr.mxu0 0.0
        %809 = vmatpush2.msra.mxu0 0.0
        %810 = vmatprep.subr.mxu0 0.0
        %811 = vmatpush2.msra.mxu0 0.0
        %812 = vmatprep.subr.mxu0 0.0
        %813 = vmatpush2.msra.mxu0 0.0
        %814 = vmatprep.subr.mxu0 0.0
        %815 = vmatpush2.msra.mxu0 0.0
        %816 = vmatprep.mubr.f32.mxu0 0.0
        %817 = vmatmul.mubr.f32.gmra.mxu0 %v750
        %v818 = vpop.f32.mrf.mxu0
        %v819 = vadd.f32 0.0, %v818
        %v820 = vpop.f32.mrf.mxu0
        %821 = vdwg.mxu0
        %v822 = vadd.f32 %v748, %v819
        %823 = vst.msk [vmem:[#allocation5] sm:$0xff] %vm641, %v822
        %824 = vst.msk [vmem:[#allocation3] sm:$0xff] %vm740, %v722
        // Predicated region
        $region53: #{tpu_custom_call.1} parent=43 // pred_check
          %p825 = pneg %p392
        $region54: #{tpu_custom_call.1} parent=43 // pred_check_branch
          %827 = sbr.rel (%p825) target = $region56
        $region55: #{tpu_custom_call.1} parent=43 // pred_region
          %v828 = vld [vmem:[#allocation5] sm:$0xff]
          %v829 = vld [vmem:[#allocation4] sm:$0xff]
          %831 = vset.pattern.permute.xlu0 0
          %832 = vperm.xlu0 %831, %v829
          %v833 = vpop.permute.xlu0 %832
          %v835 = vrcp.pop %v833
          %v836 = vmul.f32 %v828, %v835
          %v837 = vld [vmem:[#allocation6] sm:$0xff]
          %v838 = vld [vmem:[%s390] sm:$0xff]
          %v840 = vsel %vm641, %v836, 0
          %842 = vmatprep.subr.mxu0 0.0
          %843 = vmatpush1.msra.mxu0 0.0
          %844 = vmatprep.subr.mxu0 0.0
          %845 = vmatpush1.msra.mxu0 0.0
          %846 = vmatprep.subr.mxu0 0.0
          %847 = vmatpush1.msra.mxu0 0.0
          %848 = vmatprep.subr.mxu0 0.0
          %849 = vmatpush1.msra.mxu0 0.0
          %850 = vmatprep.subr.mxu0 0.0
          %851 = vmatpush1.msra.mxu0 0.0
          %852 = vmatprep.subr.mxu0 0.0
          %853 = vmatpush1.msra.mxu0 0.0
          %854 = vmatprep.subr.mxu0 0.0
          %855 = vmatpush1.msra.mxu0 0.0
          %856 = vmatprep.subr.mxu0 0.0
          %857 = vmatpush1.msra.mxu0 0.0
          %858 = vmatprep.subr.mxu0 0.0
          %859 = vmatpush1.msra.mxu0 0.0
          %860 = vmatprep.subr.mxu0 0.0
          %861 = vmatpush1.msra.mxu0 0.0
          %862 = vmatprep.subr.mxu0 0.0
          %863 = vmatpush1.msra.mxu0 0.0
          %864 = vmatprep.subr.mxu0 0.0
          %865 = vmatpush1.msra.mxu0 0.0
          %866 = vmatprep.subr.mxu0 0.0
          %867 = vmatpush1.msra.mxu0 0.0
          %868 = vmatprep.subr.mxu0 0.0
          %869 = vmatpush1.msra.mxu0 0.0
          %870 = vmatprep.subr.mxu0 0.0
          %871 = vmatpush1.msra.mxu0 0.0
          %872 = vmatprep.subr.mxu0 0.0
          %873 = vmatpush1.msra.mxu0 %v838
          %874 = vmatprep.subr.mxu0 0.0
          %875 = vmatpush2.msra.mxu0 0.0
          %876 = vmatprep.subr.mxu0 0.0
          %877 = vmatpush2.msra.mxu0 0.0
          %878 = vmatprep.subr.mxu0 0.0
          %879 = vmatpush2.msra.mxu0 0.0
          %880 = vmatprep.subr.mxu0 0.0
          %881 = vmatpush2.msra.mxu0 0.0
          %882 = vmatprep.subr.mxu0 0.0
          %883 = vmatpush2.msra.mxu0 0.0
          %884 = vmatprep.subr.mxu0 0.0
          %885 = vmatpush2.msra.mxu0 0.0
          %886 = vmatprep.subr.mxu0 0.0
          %887 = vmatpush2.msra.mxu0 0.0
          %888 = vmatprep.subr.mxu0 0.0
          %889 = vmatpush2.msra.mxu0 0.0
          %890 = vmatprep.subr.mxu0 0.0
          %891 = vmatpush2.msra.mxu0 0.0
          %892 = vmatprep.subr.mxu0 0.0
          %893 = vmatpush2.msra.mxu0 0.0
          %894 = vmatprep.subr.mxu0 0.0
          %895 = vmatpush2.msra.mxu0 0.0
          %896 = vmatprep.subr.mxu0 0.0
          %897 = vmatpush2.msra.mxu0 0.0
          %898 = vmatprep.subr.mxu0 0.0
          %899 = vmatpush2.msra.mxu0 0.0
          %900 = vmatprep.subr.mxu0 0.0
          %901 = vmatpush2.msra.mxu0 0.0
          %902 = vmatprep.subr.mxu0 0.0
          %903 = vmatpush2.msra.mxu0 0.0
          %904 = vmatprep.subr.mxu0 0.0
          %905 = vmatpush2.msra.mxu0 0.0
          %906 = vmatprep.mubr.f32.mxu0 0.0
          %907 = vmatmul.mubr.f32.gmra.mxu0 %v840
          %v908 = vpop.f32.mrf.mxu0
          %v909 = vadd.f32 0.0, %v908
          %v910 = vpop.f32.mrf.mxu0
          %911 = vdwg.mxu0
          %v912 = vadd.f32 %v837, %v909
          %913 = vst.msk [vmem:[#allocation6] sm:$0xff] %vm492, %v912
        $region56: #{tpu_custom_call.1} parent=43 // pred_fallthru
          _
        %p914 = scmp.eq.s32.totalorder %s28, 3
        %p915 = pnand %p914, %p392
        %p916 = pneg %p915
        // Predicated region
        $region57: #{tpu_custom_call.1} parent=43 // pred_check
          _
        $region58: #{tpu_custom_call.1} parent=43 // pred_check_branch
          %918 = sbr.rel (%p915) target = $region60
        $region59: #{tpu_custom_call.1} parent=43 // pred_region
          %v919 = vld [vmem:[#allocation6] sm:$0xff]
          %920 = vst.msk [vmem:[%s357] sm:$0xff] %vm492, %v919
        $region60: #{tpu_custom_call.1} parent=43 // pred_fallthru
          _
        %s921 = sand.u32 %s216, 1
        %s922 = scalar_lea.sflag [#allocation8], %s921
        %s923 = sand.u32 %s216, 1
        %s924 = smul.addr %s923, 8
        %s925 = scalar_lea.vmem [#allocation7], %s924
        // Predicated region
        $region61: #{tpu_custom_call.1} parent=43 // pred_check
          %p926 = pneg %p226
        $region62: #{tpu_custom_call.1} parent=43 // pred_check_branch
          %928 = sbr.rel (%p926) target = $region64
        $region63: #{tpu_custom_call.1} parent=43 // pred_region
          %s930 = ssub.s32 128, 128
          %931 = vsyncadd %s922, %s930
          %s932 = sadd.s32 %s27, %s26
          %s933 = smul.addr %s932, 128
          %s934 = scalar_lea.hbm %s6, %s933
          %s936 = sshll.u32 %s925, 4
          %s937 = int_to_ptr.vmem [resolvable:$true] %s936
          %939 = dma.vmem_to_hbm [thread:$0]  %s937, 128, %s934, %s922
        $region64: #{tpu_custom_call.1} parent=43 // pred_fallthru
          _
      $region44: #{tpu_custom_call.1} parent=5 // pred_fallthru
        _
      %p940 = scmp.le.s32.totalorder 2, %s15
      // Predicated region
      $region65: #{tpu_custom_call.1} parent=5 // pred_check
        %p941 = pneg %p940
      $region66: #{tpu_custom_call.1} parent=5 // pred_check_branch
        %943 = sbr.rel (%p941) target = $region68
      $region67: #{tpu_custom_call.1} parent=5 // pred_region
        %s944 = ssub.s32 %s15, 2
        // Predicated region
        $region69: #{tpu_custom_call.1} parent=67 // pred_check
          %p945 = pneg %p232
        $region70: #{tpu_custom_call.1} parent=67 // pred_check_branch
          %947 = sbr.rel (%p945) target = $region72
        $region71: #{tpu_custom_call.1} parent=67 // pred_region
          %s948 = sand.u32 %s217, 1
          %s949 = scalar_lea.sflag [#allocation8], %s948
          %s950 = sand.u32 %s217, 1
          %s951 = smul.addr %s950, 8
          %s952 = scalar_lea.vmem [#allocation7], %s951
          %953 = dma.done %s949, 128
        $region72: #{tpu_custom_call.1} parent=67 // pred_fallthru
          _
      $region68: #{tpu_custom_call.1} parent=5 // pred_fallthru
        _
    $region6: #{tpu_custom_call.1} parent=1 // loop_footer
      %s19 = sadd.s32 1, %s15
    $region7: #{tpu_custom_call.1} parent=1 // loop_footer_branch
      %14 = sbr.rel target = $region3
    $region8: #{tpu_custom_call.1} parent=1 // loop_exit
      _
    %954 = vsyncpa [#allocation8], 1
    %s955 = scalar_lea.sflag [#allocation8], 1
    %956 = vsyncpa %s955, 1

</llo_original>
